<compile_context>
chip_gen: v7x
topology: tpu7x:2x2x1
jax: 0.10.0
libtpu: 0.0.40
codegen_flags: <defaults>
</compile_context>

<pallas_src>
import functools

import jax
import jax.numpy as jnp
from jax.experimental import pallas as pl
from jax.experimental.pallas import tpu as pltpu

N_FEATURES = 160
N_ACTIONS = 52
IN_DIM = N_FEATURES + N_ACTIONS  # 212
H1 = 128
H2 = 64
OUT_DIM = 1


def _round_up(n, m):
    return ((n + m - 1) // m) * m


def _qnet_kernel(x_ref, w1_ref, b1_ref, w2_ref, b2_ref, w3_ref, b3_ref, out_ref,
                 *, compute_dtype):
    # Whole hot path (3 matmuls + bias + relu) fused in one kernel body.
    # Cast x to the MXU compute dtype in-kernel (hidden under the x DMA).
    x = x_ref[...].astype(compute_dtype)                               # (tb, 212)

    # fc1 (+ dropout == identity in eval) + ReLU.  MXU accumulates in f32.
    h1 = jnp.dot(x, w1_ref[...], preferred_element_type=jnp.float32)   # (tb, 128) f32
    h1 = jnp.maximum(h1 + b1_ref[...], 0.0)                            # f32 epilogue (v5e-safe)

    # fc2 + ReLU (re-cast activations so the MXU runs at its native bf16 rate).
    h1 = h1.astype(w2_ref.dtype)
    h2 = jnp.dot(h1, w2_ref[...], preferred_element_type=jnp.float32)  # (tb, 64) f32
    h2 = jnp.maximum(h2 + b2_ref[...], 0.0)

    # fc3: tiny N=1 projection, kept in f32.
    y = jnp.dot(h2, w3_ref[...], preferred_element_type=jnp.float32)   # (tb, 1)
    out_ref[...] = (y + b3_ref[...]).astype(out_ref.dtype)


@functools.partial(jax.jit, static_argnames=("tile_b", "use_bf16"))
def qnetwork_forward(x, params, tile_b=2048, use_bf16=True):
    """x: (B, 212) float32.  params: dict of weights/biases.  Returns (B, 1) f32."""
    w1, b1, w2, b2, w3, b3 = (
        params["w1"], params["b1"], params["w2"],
        params["b2"], params["w3"], params["b3"],
    )
    B, F = x.shape
    assert F == IN_DIM

    # Batch tile selection:
    #  * tiny batches: just round to the sublane-packing granule (no 256 floor),
    #  * large batches: big 256-aligned tile to amortize per-step overhead, but
    #    capped at round_up(cdiv(B,2), 256) so the grid has >= 2 steps and the
    #    "parallel" axis can shard across both TensorCores on v7x.
    if B < 256:
        tile = _round_up(B, 16)
    else:
        tile = min(_round_up(tile_b, 256), _round_up(-(-B // 2), 256))
    grid = (pl.cdiv(B, tile),)

    cdt = jnp.bfloat16 if use_bf16 else jnp.float32

    # Only the tiny resident weights get a boundary cast; x streams as-is (f32)
    # and is cast inside the kernel.
    w1_c = w1.astype(cdt)
    w2_c = w2.astype(cdt)
    w3_c = w3.astype(jnp.float32)
    b1_c = b1.astype(jnp.float32)
    b2_c = b2.astype(jnp.float32)
    b3_c = b3.astype(jnp.float32)

    # Batch is tiled; all weights/biases are replicated (same block every step,
    # so they are DMA'd once and stay resident in VMEM, ~70 KiB total).
    in_specs = [
        pl.BlockSpec((tile, IN_DIM), lambda i: (i, 0)),  # x  (full-K block, no pad)
        pl.BlockSpec((IN_DIM, H1), lambda i: (0, 0)),    # w1
        pl.BlockSpec((1, H1), lambda i: (0, 0)),         # b1
        pl.BlockSpec((H1, H2), lambda i: (0, 0)),        # w2
        pl.BlockSpec((1, H2), lambda i: (0, 0)),         # b2
        pl.BlockSpec((H2, OUT_DIM), lambda i: (0, 0)),   # w3
        pl.BlockSpec((1, OUT_DIM), lambda i: (0, 0)),    # b3
    ]
    # Output is (B, 1): the last (partial) block's OOB rows are simply dropped.
    out_spec = pl.BlockSpec((tile, OUT_DIM), lambda i: (i, 0))

    itemsize = 2 if use_bf16 else 4
    cost = pl.CostEstimate(
        flops=2 * B * (IN_DIM * H1 + H1 * H2 + H2 * OUT_DIM),
        transcendentals=0,
        bytes_accessed=B * IN_DIM * 4 + B * OUT_DIM * 4
        + (IN_DIM * H1 + H1 * H2) * itemsize + (H2 * OUT_DIM + H1 + H2 + OUT_DIM) * 4,
    )

    out = pl.pallas_call(
        functools.partial(_qnet_kernel, compute_dtype=cdt),
        out_shape=jax.ShapeDtypeStruct((B, OUT_DIM), jnp.float32),
        grid_spec=pltpu.PrefetchScalarGridSpec(
            num_scalar_prefetch=0,
            grid=grid,
            in_specs=in_specs,
            out_specs=out_spec,
        ),
        compiler_params=pltpu.CompilerParams(
            # Batch axis is independent -> shards across both TensorCores on v7x.
            dimension_semantics=("parallel",),
            # Headroom above the 16 MiB v5e scoped-VMEM default; safe on all gens.
            vmem_limit_bytes=32 * 1024 * 1024,
        ),
        cost_estimate=cost,
    )(x, w1_c, b1_c, w2_c, b2_c, w3_c, b3_c)

    return out


def init_params(key):
    """Deterministic init mimicking nn.Linear default (U[-1/sqrt(fan_in), +1/sqrt(fan_in)]).

    Weights are stored as (in_features, out_features) so the kernel computes
    x @ W + b (transpose of PyTorch's (out, in) storage)."""
    ks = jax.random.split(key, 6)

    def lin(kw, kb, fan_in, fan_out):
        bound = 1.0 / jnp.sqrt(jnp.float32(fan_in))
        w = jax.random.uniform(kw, (fan_in, fan_out), jnp.float32, -bound, bound)
        b = jax.random.uniform(kb, (1, fan_out), jnp.float32, -bound, bound)
        return w, b

    w1, b1 = lin(ks[0], ks[1], IN_DIM, H1)
    w2, b2 = lin(ks[2], ks[3], H1, H2)
    w3, b3 = lin(ks[4], ks[5], H2, OUT_DIM)
    return {"w1": w1, "b1": b1, "w2": w2, "b2": b2, "w3": w3, "b3": b3}


def reference_forward(x, p):
    h1 = jnp.maximum(x @ p["w1"] + p["b1"], 0.0)
    h2 = jnp.maximum(h1 @ p["w2"] + p["b2"], 0.0)
    return h2 @ p["w3"] + p["b3"]


if __name__ == "__main__":
    key = jax.random.PRNGKey(0)
    k_params, k_x = jax.random.split(key)

    params = init_params(k_params)
    B = 16  # small serving-style batch; tile rounds to 16 rows (no 256 floor)
    x = jax.random.normal(k_x, (B, IN_DIM), dtype=jnp.float32)

    ref = reference_forward(x, params)

    # Full-precision path: tight check against the JAX reference.
    out_f32 = jax.block_until_ready(qnetwork_forward(x, params, use_bf16=False))
    assert out_f32.shape == (B, OUT_DIM)
    assert jnp.allclose(out_f32, ref, atol=1e-4, rtol=1e-4), "f32 mismatch vs reference"

    # Default bf16 compute path (MXU-native): looser tolerance.
    out_bf16 = jax.block_until_ready(qnetwork_forward(x, params))
    assert out_bf16.shape == (B, OUT_DIM)
    assert jnp.allclose(out_bf16, ref, atol=5e-2, rtol=5e-2), "bf16 mismatch vs reference"

    print("KERNEL_OK")
</pallas_src>

<mosaic_0001>
module attributes {stable_mosaic.version = 11 : i64} {
  func.func @_qnet_kernel(%arg0: i32, %arg1: memref<16x212xf32, #tpu.memory_space<vmem>>, %arg2: memref<212x128xf32, #tpu.memory_space<vmem>>, %arg3: memref<1x128xf32, #tpu.memory_space<vmem>>, %arg4: memref<128x64xf32, #tpu.memory_space<vmem>>, %arg5: memref<1x64xf32, #tpu.memory_space<vmem>>, %arg6: memref<64x1xf32, #tpu.memory_space<vmem>>, %arg7: memref<1x1xf32, #tpu.memory_space<vmem>>, %arg8: memref<16x1xf32, #tpu.memory_space<vmem>>) attributes {dimension_semantics = [#tpu.dimension_semantics<parallel>], iteration_bounds = array<i64: 1>, scalar_prefetch = 0 : i64, scratch_operands = 0 : i64, tpu.core_type = #tpu.core_type<tc>, window_params = [{transform_indices = @transform_0, window_bounds = array<i64: 16, 212>}, {pipeline_mode = #tpu.pipeline_mode<synchronous>, transform_indices = @transform_1, window_bounds = array<i64: 212, 128>}, {pipeline_mode = #tpu.pipeline_mode<synchronous>, transform_indices = @transform_2, window_bounds = array<i64: 1, 128>}, {pipeline_mode = #tpu.pipeline_mode<synchronous>, transform_indices = @transform_3, window_bounds = array<i64: 128, 64>}, {pipeline_mode = #tpu.pipeline_mode<synchronous>, transform_indices = @transform_4, window_bounds = array<i64: 1, 64>}, {pipeline_mode = #tpu.pipeline_mode<synchronous>, transform_indices = @transform_5, window_bounds = array<i64: 64, 1>}, {pipeline_mode = #tpu.pipeline_mode<synchronous>, transform_indices = @transform_6, window_bounds = array<i64: 1, 1>}, {transform_indices = @transform_7, window_bounds = array<i64: 16, 1>}]} {
    %c0 = arith.constant 0 : index
    %c0_0 = arith.constant 0 : index
    %0 = vector.load %arg1[%c0, %c0_0] : memref<16x212xf32, #tpu.memory_space<vmem>>, vector<16x212xf32>
    %c0_1 = arith.constant 0 : index
    %c0_2 = arith.constant 0 : index
    %1 = vector.load %arg2[%c0_1, %c0_2] : memref<212x128xf32, #tpu.memory_space<vmem>>, vector<212x128xf32>
    %cst = arith.constant dense<0.000000e+00> : vector<16x128xf32>
    %2 = tpu.matmul %0, %1, %cst {dimension_numbers = #tpu.dot_dimension_numbers<[1], [0], [0], [1], [0, 0, 1, 1], [], []>} : vector<16x212xf32>, vector<212x128xf32>, vector<16x128xf32> -> vector<16x128xf32>
    %c0_3 = arith.constant 0 : index
    %c0_4 = arith.constant 0 : index
    %3 = vector.load %arg3[%c0_3, %c0_4] : memref<1x128xf32, #tpu.memory_space<vmem>>, vector<1x128xf32>
    %4 = vector.broadcast %3 : vector<1x128xf32> to vector<16x128xf32>
    %5 = arith.addf %2, %4 : vector<16x128xf32>
    %cst_5 = arith.constant 0.000000e+00 : f32
    %6 = vector.broadcast %cst_5 : f32 to vector<16x128xf32>
    %7 = arith.maximumf %5, %6 : vector<16x128xf32>
    %c0_6 = arith.constant 0 : index
    %c0_7 = arith.constant 0 : index
    %8 = vector.load %arg4[%c0_6, %c0_7] : memref<128x64xf32, #tpu.memory_space<vmem>>, vector<128x64xf32>
    %cst_8 = arith.constant dense<0.000000e+00> : vector<16x64xf32>
    %9 = tpu.matmul %7, %8, %cst_8 {dimension_numbers = #tpu.dot_dimension_numbers<[1], [0], [0], [1], [0, 0, 1, 1], [], []>} : vector<16x128xf32>, vector<128x64xf32>, vector<16x64xf32> -> vector<16x64xf32>
    %c0_9 = arith.constant 0 : index
    %c0_10 = arith.constant 0 : index
    %10 = vector.load %arg5[%c0_9, %c0_10] : memref<1x64xf32, #tpu.memory_space<vmem>>, vector<1x64xf32>
    %11 = vector.broadcast %10 : vector<1x64xf32> to vector<16x64xf32>
    %12 = arith.addf %9, %11 : vector<16x64xf32>
    %cst_11 = arith.constant 0.000000e+00 : f32
    %13 = vector.broadcast %cst_11 : f32 to vector<16x64xf32>
    %14 = arith.maximumf %12, %13 : vector<16x64xf32>
    %c0_12 = arith.constant 0 : index
    %c0_13 = arith.constant 0 : index
    %15 = vector.load %arg6[%c0_12, %c0_13] : memref<64x1xf32, #tpu.memory_space<vmem>>, vector<64x1xf32>
    %cst_14 = arith.constant dense<0.000000e+00> : vector<16x1xf32>
    %16 = tpu.matmul %14, %15, %cst_14 {dimension_numbers = #tpu.dot_dimension_numbers<[1], [0], [0], [1], [0, 0, 1, 1], [], []>} : vector<16x64xf32>, vector<64x1xf32>, vector<16x1xf32> -> vector<16x1xf32>
    %c0_15 = arith.constant 0 : index
    %c0_16 = arith.constant 0 : index
    %17 = vector.load %arg7[%c0_15, %c0_16] : memref<1x1xf32, #tpu.memory_space<vmem>>, vector<1x1xf32>
    %18 = vector.broadcast %17 : vector<1x1xf32> to vector<16x1xf32>
    %19 = arith.addf %16, %18 : vector<16x1xf32>
    %c0_17 = arith.constant 0 : index
    %c0_18 = arith.constant 0 : index
    %20 = vector.load %arg8[%c0_17, %c0_18] : memref<16x1xf32, #tpu.memory_space<vmem>>, vector<16x1xf32>
    tpu.vector_store %arg8[%c0_17, %c0_18], %19 {strides = array<i32>} : memref<16x1xf32, #tpu.memory_space<vmem>>, vector<16x1xf32>,
    return
  }
  func.func @transform_0(%arg0: i32) -> (i32, i32) {
    %c0_i32 = arith.constant 0 : i32
    %c0_i32_0 = arith.constant 0 : i32
    return %arg0, %c0_i32 : i32, i32
  }
  func.func @transform_1(%arg0: i32) -> (i32, i32) {
    %c0_i32 = arith.constant 0 : i32
    %c0_i32_0 = arith.constant 0 : i32
    %c0_i32_1 = arith.constant 0 : i32
    return %c0_i32, %c0_i32_0 : i32, i32
  }
  func.func @transform_2(%arg0: i32) -> (i32, i32) {
    %c0_i32 = arith.constant 0 : i32
    %c0_i32_0 = arith.constant 0 : i32
    %c0_i32_1 = arith.constant 0 : i32
    return %c0_i32, %c0_i32_0 : i32, i32
  }
  func.func @transform_3(%arg0: i32) -> (i32, i32) {
    %c0_i32 = arith.constant 0 : i32
    %c0_i32_0 = arith.constant 0 : i32
    %c0_i32_1 = arith.constant 0 : i32
    return %c0_i32, %c0_i32_0 : i32, i32
  }
  func.func @transform_4(%arg0: i32) -> (i32, i32) {
    %c0_i32 = arith.constant 0 : i32
    %c0_i32_0 = arith.constant 0 : i32
    %c0_i32_1 = arith.constant 0 : i32
    return %c0_i32, %c0_i32_0 : i32, i32
  }
  func.func @transform_5(%arg0: i32) -> (i32, i32) {
    %c0_i32 = arith.constant 0 : i32
    %c0_i32_0 = arith.constant 0 : i32
    %c0_i32_1 = arith.constant 0 : i32
    return %c0_i32, %c0_i32_0 : i32, i32
  }
  func.func @transform_6(%arg0: i32) -> (i32, i32) {
    %c0_i32 = arith.constant 0 : i32
    %c0_i32_0 = arith.constant 0 : i32
    %c0_i32_1 = arith.constant 0 : i32
    return %c0_i32, %c0_i32_0 : i32, i32
  }
  func.func @transform_7(%arg0: i32) -> (i32, i32) {
    %c0_i32 = arith.constant 0 : i32
    %c0_i32_0 = arith.constant 0 : i32
    return %arg0, %c0_i32 : i32, i32
  }
}

</mosaic_0001>

<llo_original>
// kernel: qnetwork_forward.1
$region0: #{qnetwork_forward.1}
  #allocation0 [shape = 'u32[]', space=smem, size = 0x4, offset = 0x4, fixed_abs, tag = 'smem constant byte address 0x4 - core index']
  #allocation1 [shape = 'u32[144,128]{1,0:T(1,128)}', space=vmem, size = 0x12000, scoped, tag = 'internal scratch']
  #allocation2 [shape = 'f32[1,1]{1,0:T(1,128)S(1)}', space=vmem, size = 0x200, scoped, tag = 'scoped memory for qnetwork_forward.1']
  %s0 = inlined_call_operand.vmem [shape: f32[16,212], index: 0, kind: input, shape index: {}]
  %s1 = inlined_call_operand.vmem [shape: f32[212,128], index: 1, kind: input, shape index: {}]
  %s2 = inlined_call_operand.vmem [shape: f32[1,128], index: 2, kind: input, shape index: {}]
  %s3 = inlined_call_operand.vmem [shape: f32[128,64], index: 3, kind: input, shape index: {}]
  %s4 = inlined_call_operand.vmem [shape: f32[1,64], index: 4, kind: input, shape index: {}]
  %s5 = inlined_call_operand.vmem [shape: f32[64,1], index: 5, kind: input, shape index: {}]
  %s6 = inlined_call_operand.<no memory space> [shape: f32[1,1], index: 6, kind: input, shape index: {}]
  %s7 = inlined_call_operand.vmem [shape: f32[16,1], index: 7, kind: output, shape index: {}]
  %s8 = sld [smem:[#allocation0]]
  $region38: #{qnetwork_forward.1} parent=0
    _
  %s10 = ssub.s32 1, %s8
  %s11 = scalar_select 0, %s10, %s8
  %v12 = vstv %s6
  %13 = vst [vmem:[#allocation2] sm:$0x1] %v12
  // Predicated region
  $region2: #{qnetwork_forward.1} parent=0 // pred_check
    _
  $region3: #{qnetwork_forward.1} parent=0 // pred_check_branch
    %15 = sbr.rel (0) target = $region5
  $region4: #{qnetwork_forward.1} parent=0 // pred_region
    _
  $region5: #{qnetwork_forward.1} parent=0 // pred_fallthru
    _
  // Predicated region
  $region6: #{qnetwork_forward.1} parent=0 // pred_check
    _
  $region7: #{qnetwork_forward.1} parent=0 // pred_check_branch
    %17 = sbr.rel (0) target = $region9
  $region8: #{qnetwork_forward.1} parent=0 // pred_region
    _
  $region9: #{qnetwork_forward.1} parent=0 // pred_fallthru
    _
  // Predicated region
  $region10: #{qnetwork_forward.1} parent=0 // pred_check
    _
  $region11: #{qnetwork_forward.1} parent=0 // pred_check_branch
    %19 = sbr.rel (0) target = $region13
  $region12: #{qnetwork_forward.1} parent=0 // pred_region
    _
  $region13: #{qnetwork_forward.1} parent=0 // pred_fallthru
    _
  // Predicated region
  $region14: #{qnetwork_forward.1} parent=0 // pred_check
    _
  $region15: #{qnetwork_forward.1} parent=0 // pred_check_branch
    %21 = sbr.rel (0) target = $region17
  $region16: #{qnetwork_forward.1} parent=0 // pred_region
    _
  $region17: #{qnetwork_forward.1} parent=0 // pred_fallthru
    _
  // Predicated region
  $region18: #{qnetwork_forward.1} parent=0 // pred_check
    _
  $region19: #{qnetwork_forward.1} parent=0 // pred_check_branch
    %23 = sbr.rel (0) target = $region21
  $region20: #{qnetwork_forward.1} parent=0 // pred_region
    _
  $region21: #{qnetwork_forward.1} parent=0 // pred_fallthru
    _
  // Predicated region
  $region22: #{qnetwork_forward.1} parent=0 // pred_check
    _
  $region23: #{qnetwork_forward.1} parent=0 // pred_check_branch
    %25 = sbr.rel (0) target = $region25
  $region24: #{qnetwork_forward.1} parent=0 // pred_region
    _
  $region25: #{qnetwork_forward.1} parent=0 // pred_fallthru
    _
  // Predicated region
  $region26: #{qnetwork_forward.1} parent=0 // pred_check
    _
  $region27: #{qnetwork_forward.1} parent=0 // pred_check_branch
    %27 = sbr.rel (0) target = $region29
  $region28: #{qnetwork_forward.1} parent=0 // pred_region
    _
  $region29: #{qnetwork_forward.1} parent=0 // pred_fallthru
    _
  %v28 = vld [vmem:[%s0] sm:$0xff]
  %v29 = vld [vmem:[%s0 + $0x8] sm:$0xff]
  %v30 = vld [vmem:[%s0 + $0x10] sm:$0xff]
  %v31 = vld [vmem:[%s0 + $0x18] sm:$0xff]
  %v32 = vld [vmem:[%s1] sm:$0xff]
  %v33 = vld [vmem:[%s1 + $0x8] sm:$0xff]
  %v34 = vld [vmem:[%s1 + $0x10] sm:$0xff]
  %v35 = vld [vmem:[%s1 + $0x18] sm:$0xff]
  %v36 = vld [vmem:[%s1 + $0x20] sm:$0xff]
  %v37 = vld [vmem:[%s1 + $0x28] sm:$0xff]
  %v38 = vld [vmem:[%s1 + $0x30] sm:$0xff]
  %v39 = vld [vmem:[%s1 + $0x38] sm:$0xff]
  %v40 = vld [vmem:[%s1 + $0x40] sm:$0xff]
  %v41 = vld [vmem:[%s1 + $0x48] sm:$0xff]
  %v42 = vld [vmem:[%s1 + $0x50] sm:$0xff]
  %v43 = vld [vmem:[%s1 + $0x58] sm:$0xff]
  %v44 = vld [vmem:[%s1 + $0x60] sm:$0xff]
  %v45 = vld [vmem:[%s1 + $0x68] sm:$0xff]
  %v46 = vld [vmem:[%s1 + $0x70] sm:$0xff]
  %v47 = vld [vmem:[%s1 + $0x78] sm:$0xff]
  %v48 = vld [vmem:[%s1 + $0x80] sm:$0xff]
  %v49 = vld [vmem:[%s1 + $0x88] sm:$0xff]
  %v50 = vld [vmem:[%s1 + $0x90] sm:$0xff]
  %v51 = vld [vmem:[%s1 + $0x98] sm:$0xff]
  %v52 = vld [vmem:[%s1 + $0xa0] sm:$0xff]
  %v53 = vld [vmem:[%s1 + $0xa8] sm:$0xff]
  %v54 = vld [vmem:[%s1 + $0xb0] sm:$0xff]
  %v55 = vld [vmem:[%s1 + $0xb8] sm:$0xff]
  %v56 = vld [vmem:[%s1 + $0xc0] sm:$0xff]
  %v57 = vld [vmem:[%s1 + $0xc8] sm:$0xff]
  %v58 = vld [vmem:[%s1 + $0xd0] sm:$0xf]
  %v59 = vld [vmem:[%s2] sm:$0x1]
  %v61 = vlaneseq
  %v62 = vshrl.u32 %v61, 7
  %v63 = vsub.s32 0, %v62
  %v64 = vrot.slane %v59, %v63
  %vm66 = vcmask 687104
  %v68 = vsel %vm66, %v29, 0
  %v71 = vsel %vm66, %v31, 0
  %vm73 = vcmask 1043456
  %v75 = vsel %vm73, %v58, 0
  %77 = vmatprep.subr.mxu0 0.0
  %78 = vmatpush1.msra.mxu0 %v32
  %79 = vmatprep.subr.mxu0 0.0
  %80 = vmatpush1.msra.mxu0 %v33
  %81 = vmatprep.subr.mxu0 0.0
  %82 = vmatpush1.msra.mxu0 %v34
  %83 = vmatprep.subr.mxu0 0.0
  %84 = vmatpush1.msra.mxu0 %v35
  %85 = vmatprep.subr.mxu0 0.0
  %86 = vmatpush1.msra.mxu0 %v36
  %87 = vmatprep.subr.mxu0 0.0
  %88 = vmatpush1.msra.mxu0 %v37
  %89 = vmatprep.subr.mxu0 0.0
  %90 = vmatpush1.msra.mxu0 %v38
  %91 = vmatprep.subr.mxu0 0.0
  %92 = vmatpush1.msra.mxu0 %v39
  %93 = vmatprep.subr.mxu0 0.0
  %94 = vmatpush1.msra.mxu0 %v40
  %95 = vmatprep.subr.mxu0 0.0
  %96 = vmatpush1.msra.mxu0 %v41
  %97 = vmatprep.subr.mxu0 0.0
  %98 = vmatpush1.msra.mxu0 %v42
  %99 = vmatprep.subr.mxu0 0.0
  %100 = vmatpush1.msra.mxu0 %v43
  %101 = vmatprep.subr.mxu0 0.0
  %102 = vmatpush1.msra.mxu0 %v44
  %103 = vmatprep.subr.mxu0 0.0
  %104 = vmatpush1.msra.mxu0 %v45
  %105 = vmatprep.subr.mxu0 0.0
  %106 = vmatpush1.msra.mxu0 %v46
  %107 = vmatprep.subr.mxu0 0.0
  %108 = vmatpush1.msra.mxu0 %v47
  %109 = vmatprep.subr.mxu0 0.0
  %110 = vmatpush1.msra.mxu0 %v48
  %111 = vmatprep.subr.mxu0 0.0
  %112 = vmatpush1.msra.mxu0 %v49
  %113 = vmatprep.subr.mxu0 0.0
  %114 = vmatpush1.msra.mxu0 %v50
  %115 = vmatprep.subr.mxu0 0.0
  %116 = vmatpush1.msra.mxu0 %v51
  %117 = vmatprep.subr.mxu0 0.0
  %118 = vmatpush1.msra.mxu0 %v52
  %119 = vmatprep.subr.mxu0 0.0
  %120 = vmatpush1.msra.mxu0 %v53
  %121 = vmatprep.subr.mxu0 0.0
  %122 = vmatpush1.msra.mxu0 %v54
  %123 = vmatprep.subr.mxu0 0.0
  %124 = vmatpush1.msra.mxu0 %v55
  %125 = vmatprep.subr.mxu0 0.0
  %126 = vmatpush1.msra.mxu0 %v56
  %127 = vmatprep.subr.mxu0 0.0
  %128 = vmatpush1.msra.mxu0 %v57
  %129 = vmatprep.subr.mxu0 0.0
  %130 = vmatpush1.msra.mxu0 %v75
  %131 = vmatprep.subr.mxu0 0.0
  %132 = vmatpush1.msra.mxu0 0.0
  %133 = vmatprep.subr.mxu0 0.0
  %134 = vmatpush1.msra.mxu0 0.0
  %135 = vmatprep.subr.mxu0 0.0
  %136 = vmatpush1.msra.mxu0 0.0
  %137 = vmatprep.subr.mxu0 0.0
  %138 = vmatpush1.msra.mxu0 0.0
  %139 = vmatprep.subr.mxu0 0.0
  %140 = vmatpush1.msra.mxu0 0.0
  %141 = vmatprep.mubr.f32.mxu0 %v68
  %142 = vmatmul.mubr.f32.gmra.mrb[0].mxu0 %v28
  %v143 = vpop.f32.mrb[0].mxu0
  %v144 = vadd.f32 %v64, %v143
  %v145 = vpop.f32.mrb[0].mxu0
  %146 = vmatprep.mubr.f32.mxu0 %v71
  %147 = vmatmul.mubr.f32.gmra.mrb[0].mxu0 %v30
  %v148 = vpop.f32.mrb[0].mxu0
  %v149 = vadd.f32 %v64, %v148
  %v150 = vpop.f32.mrb[0].mxu0
  %151 = vdwg.mxu0
  %v152 = vmax.f32 %v144, 0.0
  %v153 = vmax.f32 %v149, 0.0
  %v154 = vld [vmem:[%s3] sm:$0xff]
  %v155 = vld [vmem:[%s3 + $0x8] sm:$0xff]
  %v156 = vld [vmem:[%s3 + $0x10] sm:$0xff]
  %v157 = vld [vmem:[%s3 + $0x18] sm:$0xff]
  %v158 = vld [vmem:[%s3 + $0x20] sm:$0xff]
  %v159 = vld [vmem:[%s3 + $0x28] sm:$0xff]
  %v160 = vld [vmem:[%s3 + $0x30] sm:$0xff]
  %v161 = vld [vmem:[%s3 + $0x38] sm:$0xff]
  %v162 = vld [vmem:[%s3 + $0x40] sm:$0xff]
  %v163 = vld [vmem:[%s3 + $0x48] sm:$0xff]
  %v164 = vld [vmem:[%s3 + $0x50] sm:$0xff]
  %v165 = vld [vmem:[%s3 + $0x58] sm:$0xff]
  %v166 = vld [vmem:[%s3 + $0x60] sm:$0xff]
  %v167 = vld [vmem:[%s3 + $0x68] sm:$0xff]
  %v168 = vld [vmem:[%s3 + $0x70] sm:$0xff]
  %v169 = vld [vmem:[%s3 + $0x78] sm:$0xff]
  %v170 = vld [vmem:[%s4] sm:$0x1]
  %v172 = vlaneseq
  %v173 = vshrl.u32 %v172, 7
  %v174 = vsub.s32 0, %v173
  %v175 = vrot.slane %v170, %v174
  %177 = vmatprep.subr.mxu0 0.0
  %178 = vmatpush1.msra.mxu0 %v154
  %179 = vmatprep.subr.mxu0 0.0
  %180 = vmatpush1.msra.mxu0 %v155
  %181 = vmatprep.subr.mxu0 0.0
  %182 = vmatpush1.msra.mxu0 %v156
  %183 = vmatprep.subr.mxu0 0.0
  %184 = vmatpush1.msra.mxu0 %v157
  %185 = vmatprep.subr.mxu0 0.0
  %186 = vmatpush1.msra.mxu0 %v158
  %187 = vmatprep.subr.mxu0 0.0
  %188 = vmatpush1.msra.mxu0 %v159
  %189 = vmatprep.subr.mxu0 0.0
  %190 = vmatpush1.msra.mxu0 %v160
  %191 = vmatprep.subr.mxu0 0.0
  %192 = vmatpush1.msra.mxu0 %v161
  %193 = vmatprep.subr.mxu0 0.0
  %194 = vmatpush1.msra.mxu0 %v162
  %195 = vmatprep.subr.mxu0 0.0
  %196 = vmatpush1.msra.mxu0 %v163
  %197 = vmatprep.subr.mxu0 0.0
  %198 = vmatpush1.msra.mxu0 %v164
  %199 = vmatprep.subr.mxu0 0.0
  %200 = vmatpush1.msra.mxu0 %v165
  %201 = vmatprep.subr.mxu0 0.0
  %202 = vmatpush1.msra.mxu0 %v166
  %203 = vmatprep.subr.mxu0 0.0
  %204 = vmatpush1.msra.mxu0 %v167
  %205 = vmatprep.subr.mxu0 0.0
  %206 = vmatpush1.msra.mxu0 %v168
  %207 = vmatprep.subr.mxu0 0.0
  %208 = vmatpush1.msra.mxu0 %v169
  %209 = vmatprep.subr.mxu0 0.0
  %210 = vmatpush1.msra.mxu0 0.0
  %211 = vmatprep.subr.mxu0 0.0
  %212 = vmatpush1.msra.mxu0 0.0
  %213 = vmatprep.subr.mxu0 0.0
  %214 = vmatpush1.msra.mxu0 0.0
  %215 = vmatprep.subr.mxu0 0.0
  %216 = vmatpush1.msra.mxu0 0.0
  %217 = vmatprep.subr.mxu0 0.0
  %218 = vmatpush1.msra.mxu0 0.0
  %219 = vmatprep.subr.mxu0 0.0
  %220 = vmatpush1.msra.mxu0 0.0
  %221 = vmatprep.subr.mxu0 0.0
  %222 = vmatpush1.msra.mxu0 0.0
  %223 = vmatprep.subr.mxu0 0.0
  %224 = vmatpush1.msra.mxu0 0.0
  %225 = vmatprep.subr.mxu0 0.0
  %226 = vmatpush1.msra.mxu0 0.0
  %227 = vmatprep.subr.mxu0 0.0
  %228 = vmatpush1.msra.mxu0 0.0
  %229 = vmatprep.subr.mxu0 0.0
  %230 = vmatpush1.msra.mxu0 0.0
  %231 = vmatprep.subr.mxu0 0.0
  %232 = vmatpush1.msra.mxu0 0.0
  %233 = vmatprep.subr.mxu0 0.0
  %234 = vmatpush1.msra.mxu0 0.0
  %235 = vmatprep.subr.mxu0 0.0
  %236 = vmatpush1.msra.mxu0 0.0
  %237 = vmatprep.subr.mxu0 0.0
  %238 = vmatpush1.msra.mxu0 0.0
  %239 = vmatprep.subr.mxu0 0.0
  %240 = vmatpush1.msra.mxu0 0.0
  %241 = vmatprep.mubr.f32.mxu0 0.0
  %242 = vmatmul.mubr.f32.gmra.mrb[0].mxu0 %v152
  %v243 = vpop.f32.mrb[0].mxu0
  %v244 = vadd.f32 %v175, %v243
  %v245 = vpop.f32.mrb[0].mxu0
  %246 = vmatprep.mubr.f32.mxu0 0.0
  %247 = vmatmul.mubr.f32.gmra.mrb[0].mxu0 %v153
  %v248 = vpop.f32.mrb[0].mxu0
  %v249 = vadd.f32 %v175, %v248
  %v250 = vpop.f32.mrb[0].mxu0
  %251 = vdwg.mxu0
  %v252 = vmax.f32 %v244, 0.0
  %v253 = vmax.f32 %v249, 0.0
  %v254 = vld [vmem:[%s5] sm:$0xff]
  %v255 = vld [vmem:[%s5 + $0x8] sm:$0xff]
  %v256 = vld [vmem:[%s5 + $0x10] sm:$0xff]
  %v257 = vld [vmem:[%s5 + $0x18] sm:$0xff]
  %v258 = vld [vmem:[%s5 + $0x20] sm:$0xff]
  %v259 = vld [vmem:[%s5 + $0x28] sm:$0xff]
  %v260 = vld [vmem:[%s5 + $0x30] sm:$0xff]
  %v261 = vld [vmem:[%s5 + $0x38] sm:$0xff]
  %v262 = vld [vmem:[#allocation2] sm:$0x1]
  %v264 = vlaneseq
  %v265 = vshrl.u32 %v264, 7
  %v266 = vsub.s32 0, %v265
  %v267 = vrot.slane %v262, %v266
  %vm269 = vcmask 523264
  %v271 = vsel %vm269, %v252, 0
  %v274 = vsel %vm269, %v253, 0
  %276 = vmatprep.subr.mxu0 0.0
  %277 = vmatpush1.msra.mxu0 %v254
  %278 = vmatprep.subr.mxu0 0.0
  %279 = vmatpush1.msra.mxu0 %v255
  %280 = vmatprep.subr.mxu0 0.0
  %281 = vmatpush1.msra.mxu0 %v256
  %282 = vmatprep.subr.mxu0 0.0
  %283 = vmatpush1.msra.mxu0 %v257
  %284 = vmatprep.subr.mxu0 0.0
  %285 = vmatpush1.msra.mxu0 %v258
  %286 = vmatprep.subr.mxu0 0.0
  %287 = vmatpush1.msra.mxu0 %v259
  %288 = vmatprep.subr.mxu0 0.0
  %289 = vmatpush1.msra.mxu0 %v260
  %290 = vmatprep.subr.mxu0 0.0
  %291 = vmatpush1.msra.mxu0 %v261
  %292 = vmatprep.subr.mxu0 0.0
  %293 = vmatpush1.msra.mxu0 0.0
  %294 = vmatprep.subr.mxu0 0.0
  %295 = vmatpush1.msra.mxu0 0.0
  %296 = vmatprep.subr.mxu0 0.0
  %297 = vmatpush1.msra.mxu0 0.0
  %298 = vmatprep.subr.mxu0 0.0
  %299 = vmatpush1.msra.mxu0 0.0
  %300 = vmatprep.subr.mxu0 0.0
  %301 = vmatpush1.msra.mxu0 0.0
  %302 = vmatprep.subr.mxu0 0.0
  %303 = vmatpush1.msra.mxu0 0.0
  %304 = vmatprep.subr.mxu0 0.0
  %305 = vmatpush1.msra.mxu0 0.0
  %306 = vmatprep.subr.mxu0 0.0
  %307 = vmatpush1.msra.mxu0 0.0
  %308 = vmatprep.subr.mxu0 0.0
  %309 = vmatpush1.msra.mxu0 0.0
  %310 = vmatprep.subr.mxu0 0.0
  %311 = vmatpush1.msra.mxu0 0.0
  %312 = vmatprep.subr.mxu0 0.0
  %313 = vmatpush1.msra.mxu0 0.0
  %314 = vmatprep.subr.mxu0 0.0
  %315 = vmatpush1.msra.mxu0 0.0
  %316 = vmatprep.subr.mxu0 0.0
  %317 = vmatpush1.msra.mxu0 0.0
  %318 = vmatprep.subr.mxu0 0.0
  %319 = vmatpush1.msra.mxu0 0.0
  %320 = vmatprep.subr.mxu0 0.0
  %321 = vmatpush1.msra.mxu0 0.0
  %322 = vmatprep.subr.mxu0 0.0
  %323 = vmatpush1.msra.mxu0 0.0
  %324 = vmatprep.subr.mxu0 0.0
  %325 = vmatpush1.msra.mxu0 0.0
  %326 = vmatprep.subr.mxu0 0.0
  %327 = vmatpush1.msra.mxu0 0.0
  %328 = vmatprep.subr.mxu0 0.0
  %329 = vmatpush1.msra.mxu0 0.0
  %330 = vmatprep.subr.mxu0 0.0
  %331 = vmatpush1.msra.mxu0 0.0
  %332 = vmatprep.subr.mxu0 0.0
  %333 = vmatpush1.msra.mxu0 0.0
  %334 = vmatprep.subr.mxu0 0.0
  %335 = vmatpush1.msra.mxu0 0.0
  %336 = vmatprep.subr.mxu0 0.0
  %337 = vmatpush1.msra.mxu0 0.0
  %338 = vmatprep.subr.mxu0 0.0
  %339 = vmatpush1.msra.mxu0 0.0
  %340 = vmatprep.mubr.f32.mxu0 0.0
  %341 = vmatmul.mubr.f32.gmra.mrb[0].mxu0 %v271
  %v342 = vpop.f32.mrb[0].mxu0
  %v343 = vadd.f32 %v267, %v342
  %v344 = vpop.f32.mrb[0].mxu0
  %345 = vmatprep.mubr.f32.mxu0 0.0
  %346 = vmatmul.mubr.f32.gmra.mrb[0].mxu0 %v274
  %v347 = vpop.f32.mrb[0].mxu0
  %v348 = vadd.f32 %v267, %v347
  %v349 = vpop.f32.mrb[0].mxu0
  %350 = vdwg.mxu0
  %vm351 = vcmask 7168
  %352 = vst.msk [vmem:[%s7] sm:$0xff] %vm351, %v343
  %353 = vst.msk [vmem:[%s7 + $0x8] sm:$0xff] %vm351, %v348
  // Predicated region
  $region30: #{qnetwork_forward.1} parent=0 // pred_check
    _
  $region31: #{qnetwork_forward.1} parent=0 // pred_check_branch
    %355 = sbr.rel (0) target = $region33
  $region32: #{qnetwork_forward.1} parent=0 // pred_region
    _
  $region33: #{qnetwork_forward.1} parent=0 // pred_fallthru
    _
  // Predicated region
  $region34: #{qnetwork_forward.1} parent=0 // pred_check
    _
  $region35: #{qnetwork_forward.1} parent=0 // pred_check_branch
    %357 = sbr.rel (0) target = $region37
  $region36: #{qnetwork_forward.1} parent=0 // pred_region
    _
  $region37: #{qnetwork_forward.1} parent=0 // pred_fallthru
    _

</llo_original>
